<compile_context>
chip_gen: v6e
topology: v6e:2x2x1
jax: 0.10.0
libtpu: 0.0.40
codegen_flags: <defaults>
</compile_context>

<pallas_src>
import functools

import jax
import jax.numpy as jnp
import numpy as np
from jax import lax
from jax.experimental import pallas as pl
from jax.experimental.pallas import tpu as pltpu

LANES = 128


def _round_up(x, m):
    return (x + m - 1) // m * m


def _fr_seg_kernel(x_ref, t_ref, u_ref, nll_ref, ubin_ref, stats_ref, *,
                   hw, chunk, masked_tail):
    """Fused per-pixel pass.

    x_ref    : (1, C, TR, 128)   logits tile
    t_ref    : (1, 1, TR, 128)   int8 targets tile (-1 = ignore / pad)
    u_ref    : (1, J, TR, 128)   unary tile
    nll_ref  : (1, 1, TR, 128)   f32 per-pixel CE (0 where ignored / padded)
    ubin_ref : (1, J, TR, 128)   unary * [target == 2+j]   (unarys dtype)
    stats_ref: (1, 1, (2+J)*8, 128) f32 per-tile sublane partials:
               rows  0: 7   background CE sum (targets in {0,1})
               rows  8(1+j)..: count of target == 2+j
               rows  8(1+J)..: sum_j (unary - target_bin)^2
    """
    C = x_ref.shape[1]
    J = u_ref.shape[1]
    TR, L = x_ref.shape[2], x_ref.shape[3]
    n_chunks = TR // chunk

    def run(masked):
        i = pl.program_id(1)

        def chunk_step(ci, carry):
            off = ci * chunk
            if not isinstance(off, int):
                off = pl.multiple_of(off, chunk)

            t = t_ref[0, 0, pl.ds(off, chunk), :].astype(jnp.int32)   # (chunk,L)

            if masked:
                row = lax.broadcasted_iota(jnp.int32, (chunk, L), 0)
                lane = lax.broadcasted_iota(jnp.int32, (chunk, L), 1)
                pix = (i * TR + off + row) * L + lane
                valid = pix < hw

            # --- log-softmax over classes: cast each plane once, one exp pass ---
            xs = [x_ref[0, c, pl.ds(off, chunk), :].astype(jnp.float32)
                  for c in range(C)]
            m = xs[0]
            for c in range(1, C):
                m = jnp.maximum(m, xs[c])
            sez = jnp.zeros((chunk, L), jnp.float32)
            zt = jnp.zeros((chunk, L), jnp.float32)
            for c in range(C):
                zc = xs[c] - m
                sez = sez + jnp.exp(zc)
                zt = zt + jnp.where(t == c, zc, 0.0)
            nll = jnp.log(sez) - zt                       # -log p[target]
            keep = t >= 0                                 # CE ignore_index = -1
            if masked:
                keep = keep & valid
            nll = jnp.where(keep, nll, 0.0)
            nll_ref[0, 0, pl.ds(off, chunk), :] = nll

            # --- background CE partial (targets in {0,1}) -----------------------
            bg = (t == 0) | (t == 1)
            if masked:
                bg = bg & valid
            bg_part = jnp.where(bg, nll, 0.0)

            # --- foreground channels: unarys_bin, counts, squared error ---------
            sq = jnp.zeros((chunk, L), jnp.float32)
            cnt_parts = []
            for j in range(J):
                uj = u_ref[0, j, pl.ds(off, chunk), :].astype(jnp.float32)
                if masked:
                    uj = jnp.where(valid, uj, 0.0)
                fg = t == 2 + j
                if masked:
                    fg = fg & valid
                tb = jnp.where(fg, 1.0, 0.0)
                ubin_ref[0, j, pl.ds(off, chunk), :] = (uj * tb).astype(
                    ubin_ref.dtype)
                sq = sq + (uj - tb) * (uj - tb)
                cnt_parts.append(tb)

            # (chunk,L) -> (8,L) sublane partials: pure aligned VALU adds, no XLU.
            def fold8(v):
                return jnp.sum(v.reshape(chunk // 8, 8, L), axis=0)

            new = [carry[0] + fold8(bg_part), carry[1] + fold8(sq)]
            for j in range(J):
                new.append(carry[2 + j] + fold8(cnt_parts[j]))
            return tuple(new)

        init = tuple(jnp.zeros((8, L), jnp.float32) for _ in range(2 + J))
        if n_chunks == 1:
            res = chunk_step(0, init)
        else:
            res = lax.fori_loop(0, n_chunks, chunk_step, init)

        # Single unmasked full-block store of all partials (row order:
        # bg, counts..., sq); the final tiny reduce happens in JAX.
        rows = [res[0]] + [res[2 + j] for j in range(J)] + [res[1]]
        stats_ref[0, 0] = jnp.concatenate(rows, axis=0)

    if not masked_tail:
        run(False)
    else:
        last = pl.num_programs(1) - 1

        @pl.when(pl.program_id(1) < last)
        def _():
            run(False)

        @pl.when(pl.program_id(1) == last)
        def _():
            run(True)


def fr_seg_loss(inputs, targets, unarys, frs, old_frs, *, num_classes,
                alpha=1.0, beta=3.0, momentum=0.8,
                block_rows=None, chunk_rows=32, k_max=None):
    """FRSegLoss.forward.  Returns (loss, filling_rates).

    k_max: optional static cap on the per-(b,j) top-k width (filling_rate *
    num_unary).  None = exact (full-width top_k); a value << H*W removes the
    O(HW log HW) post-kernel sort for large images.
    """
    B, C, H, W = inputs.shape
    assert C == num_classes
    J = 1 if num_classes == 3 else 2
    assert unarys.shape == (B, J, H, W)
    assert frs.shape == (B, J) and old_frs.shape == (B, J)
    S = 2 + J
    HW = H * W
    # Pad pixel count to a multiple of 32*128 so every block satisfies the
    # int8 (32,128) / f32 (8,128) tiling rules (padded pixels carry t=-1, u=0).
    HWp = _round_up(HW, 32 * LANES)

    x = inputs.reshape(B, C, HW)
    t = targets.astype(jnp.int8).reshape(B, 1, HW)         # labels fit in int8
    u = unarys.reshape(B, J, HW)
    if HWp != HW:
        pad = HWp - HW
        x = jnp.pad(x, ((0, 0), (0, 0), (0, pad)))
        t = jnp.pad(t, ((0, 0), (0, 0), (0, pad)), constant_values=-1)
        u = jnp.pad(u, ((0, 0), (0, 0), (0, pad)))
    R = HWp // LANES
    x = x.reshape(B, C, R, LANES)
    t = t.reshape(B, 1, R, LANES)
    u = u.reshape(B, J, R, LANES)

    # Generation-aware tiling: v7x has 64 MiB VMEM/TC, v5e/v6e have 128 MiB.
    try:
        vmem_cap = int(getattr(pltpu.get_tpu_info(), "vmem_capacity_bytes",
                               64 * 2 ** 20))
    except Exception:
        vmem_cap = 64 * 2 ** 20
    if block_rows is None:
        block_rows = 2048 if vmem_cap >= 100 * 2 ** 20 else 1024
    block_rows = max(32, (block_rows // 32) * 32)
    TR = R if R <= block_rows else block_rows               # rows per tile
    T = pl.cdiv(R, TR)                                      # pixel tiles / batch
    need_mask = (R % TR) != 0        # only a ragged last tile needs in-kernel masks

    # Inner strip-mining chunk: multiple of 32 rows (int8 native tile aligned).
    chunk = max(32, (min(max(32, chunk_rows), TR) // 32) * 32)
    while TR % chunk:
        chunk -= 32

    ubin_dtype = unarys.dtype        # map used only for ordering downstream

    in_bytes = TR * LANES * (C * x.dtype.itemsize + t.dtype.itemsize
                             + J * u.dtype.itemsize)
    out_bytes = TR * LANES * (4 + J * jnp.dtype(ubin_dtype).itemsize) \
        + S * 8 * LANES * 4
    vmem_limit = int(min(max(vmem_cap - (16 << 20), 32 << 20),
                         max(32 << 20, 4 * (in_bytes + out_bytes))))

    kernel = functools.partial(_fr_seg_kernel, hw=HW, chunk=chunk,
                               masked_tail=need_mask)

    nll_map, ubin_map, stats_pl = pl.pallas_call(
        kernel,
        out_shape=(
            jax.ShapeDtypeStruct((B, 1, R, LANES), jnp.float32),
            jax.ShapeDtypeStruct((B, J, R, LANES), ubin_dtype),
            jax.ShapeDtypeStruct((B, T, S * 8, LANES), jnp.float32),
        ),
        grid_spec=pltpu.PrefetchScalarGridSpec(
            num_scalar_prefetch=0,
            grid=(B, T),
            in_specs=[
                pl.BlockSpec((1, C, TR, LANES), lambda b, i: (b, 0, i, 0)),
                pl.BlockSpec((1, 1, TR, LANES), lambda b, i: (b, 0, i, 0)),
                pl.BlockSpec((1, J, TR, LANES), lambda b, i: (b, 0, i, 0)),
            ],
            out_specs=(
                pl.BlockSpec((1, 1, TR, LANES), lambda b, i: (b, 0, i, 0)),
                pl.BlockSpec((1, J, TR, LANES), lambda b, i: (b, 0, i, 0)),
                pl.BlockSpec((1, 1, S * 8, LANES), lambda b, i: (b, i, 0, 0)),
            ),
        ),
        compiler_params=pltpu.CompilerParams(
            dimension_semantics=("parallel", "parallel"),   # megacore on v7x
            vmem_limit_bytes=vmem_limit,
        ),
    )(x, t, u)

    # Tiny final reduce of the per-tile sublane/lane partials.
    stats = jnp.sum(stats_pl.reshape(B, T, S, 8, LANES), axis=(1, 3, 4))  # (B,S)
    bg_sum = jnp.sum(stats[:, 0])
    num_unary = stats[:, 1:1 + J]                           # (B, J) exact counts
    mse_sum = jnp.sum(stats[:, 1 + J])

    frs = frs.astype(jnp.float32)
    old_frs = old_frs.astype(jnp.float32)
    filling_rates = momentum * frs + (1.0 - momentum) * old_frs
    topk = lax.stop_gradient(filling_rates * num_unary)     # (B, J)

    # TopKSegLoss: background CE over targets {0,1}
    loss_bg = bg_sum / (B * H * W - jnp.sum(num_unary) + 1.0)

    # TopKSegLoss: foreground CE over the top-int(topk) pixels of unarys_bin.
    # TODO(synk): torch.topk with a data-dependent k has no static-shape Pallas
    # equivalent; we top_k with static width K (exact when k_max=None) and mask
    # rank < floor(topk), clamping k to K when a cap is supplied.
    K = HW if k_max is None else int(min(HW, max(1, int(k_max))))
    nll_flat = nll_map.reshape(B, R * LANES)[:, :HW]        # (B, HW)
    ubin_flat = ubin_map.reshape(B, J, R * LANES)[:, :, :HW].astype(jnp.float32)
    _, order = lax.top_k(ubin_flat, K)                      # (B, J, K)
    nll_sel = jax.vmap(lambda n, o: n[o])(
        nll_flat, order.reshape(B, J * K)).reshape(B, J, K)
    k_int = jnp.minimum(jnp.floor(topk), float(K)).astype(jnp.int32)
    rank = jnp.arange(K, dtype=jnp.int32)
    loss_fg = jnp.sum(jnp.where(rank[None, None, :] < k_int[:, :, None],
                                nll_sel, 0.0))
    loss_fg = loss_fg / (jnp.sum(topk) + 1.0)

    topk_term = 0.5 * (loss_bg + loss_fg)
    unary_term = mse_sum / (B * J * H * W)                  # MSE, reduction='mean'
    fr_term = jnp.mean(filling_rates)
    loss = topk_term + alpha * unary_term - beta * fr_term
    return loss, filling_rates


def _reference(inputs, targets, unarys, frs, old_frs, *, num_classes,
               alpha=1.0, beta=3.0, momentum=0.8):
    """Pure-JAX reference of the PyTorch FRSegLoss forward (intended semantics)."""
    B, C, H, W = inputs.shape
    HW = H * W
    J = 1 if num_classes == 3 else 2
    x = inputs.astype(jnp.float32).reshape(B, C, HW)
    t = targets.astype(jnp.int32).reshape(B, HW)
    u = unarys.astype(jnp.float32).reshape(B, J, HW)

    logp = jax.nn.log_softmax(x, axis=1)
    safe_t = jnp.clip(t, 0, C - 1)
    nll = -jnp.take_along_axis(logp, safe_t[:, None, :], axis=1)[:, 0, :]
    nll = jnp.where(t >= 0, nll, 0.0)                       # CE(ignore_index=-1)

    tbin = jnp.stack([(t == 2 + j).astype(jnp.float32) for j in range(J)], axis=1)
    ubin = u * tbin
    num_unary = jnp.sum(tbin, axis=-1)                      # (B, J)
    filling_rates = (momentum * frs.astype(jnp.float32)
                     + (1 - momentum) * old_frs.astype(jnp.float32))
    topk = filling_rates * num_unary

    bg = (t == 0) | (t == 1)
    loss_bg = jnp.sum(jnp.where(bg, nll, 0.0)) / (B * H * W - jnp.sum(num_unary) + 1.0)

    loss_fg = 0.0
    rank = jnp.arange(HW)
    for b in range(B):
        for j in range(J):
            _, idx = lax.top_k(ubin[b, j], HW)
            k = jnp.floor(topk[b, j]).astype(jnp.int32)
            loss_fg = loss_fg + jnp.sum(jnp.where(rank < k, nll[b][idx], 0.0))
    loss_fg = loss_fg / (jnp.sum(topk) + 1.0)

    topk_term = 0.5 * (loss_bg + loss_fg)
    unary_term = jnp.mean((u - tbin) ** 2)
    fr_term = jnp.mean(filling_rates)
    loss = topk_term + alpha * unary_term - beta * fr_term
    return loss, filling_rates


if __name__ == "__main__":
    key = jax.random.PRNGKey(0)
    B, H, W = 2, 16, 16

    for num_classes in (4, 3):
        C = num_classes
        J = 2 if C == 4 else 1
        key, k1, k2, k3, k4, k5 = jax.random.split(key, 6)
        logits = jax.random.normal(k1, (B, C, H, W), dtype=jnp.float32)
        targets = jax.random.randint(k2, (B, H, W), -1, C, dtype=jnp.int32)
        unarys = jax.random.uniform(k3, (B, J, H, W), dtype=jnp.float32)
        frs = jax.random.uniform(k4, (B, J), dtype=jnp.float32)
        old_frs = jax.random.uniform(k5, (B, J), dtype=jnp.float32)

        loss, fr = fr_seg_loss(logits, targets, unarys, frs, old_frs,
                               num_classes=num_classes)
        loss = jax.block_until_ready(loss)

        ref_loss, ref_fr = _reference(logits, targets, unarys, frs, old_frs,
                                      num_classes=num_classes)
        ref_loss = jax.block_until_ready(ref_loss)

        np.testing.assert_allclose(np.asarray(loss), np.asarray(ref_loss),
                                   rtol=1e-4, atol=1e-5)
        np.testing.assert_allclose(np.asarray(fr), np.asarray(ref_fr),
                                   rtol=1e-6, atol=1e-6)

    print("KERNEL_OK")
</pallas_src>

<mosaic_0001>
module attributes {stable_mosaic.version = 11 : i64} {
  func.func @_fr_seg_kernel(%arg0: i32, %arg1: i32, %arg2: memref<1x4x32x128xf32, #tpu.memory_space<vmem>>, %arg3: memref<1x1x32x128xi8, #tpu.memory_space<vmem>>, %arg4: memref<1x2x32x128xf32, #tpu.memory_space<vmem>>, %arg5: memref<1x1x32x128xf32, #tpu.memory_space<vmem>>, %arg6: memref<1x2x32x128xf32, #tpu.memory_space<vmem>>, %arg7: memref<1x1x32x128xf32, #tpu.memory_space<vmem>>) attributes {dimension_semantics = [#tpu.dimension_semantics<parallel>, #tpu.dimension_semantics<parallel>], iteration_bounds = array<i64: 2, 1>, scalar_prefetch = 0 : i64, scratch_operands = 0 : i64, tpu.core_type = #tpu.core_type<tc>, window_params = [{transform_indices = @transform_0, window_bounds = array<i64: 1, 4, 32, 128>}, {transform_indices = @transform_1, window_bounds = array<i64: 1, 1, 32, 128>}, {transform_indices = @transform_2, window_bounds = array<i64: 1, 2, 32, 128>}, {transform_indices = @transform_3, window_bounds = array<i64: 1, 1, 32, 128>}, {transform_indices = @transform_4, window_bounds = array<i64: 1, 2, 32, 128>}, {transform_indices = @transform_5, window_bounds = array<i64: 1, 1, 32, 128>}]} {
    %cst = arith.constant 0.000000e+00 : f32
    %0 = vector.broadcast %cst : f32 to vector<8x128xf32>
    %cst_0 = arith.constant 0.000000e+00 : f32
    %1 = vector.broadcast %cst_0 : f32 to vector<8x128xf32>
    %cst_1 = arith.constant 0.000000e+00 : f32
    %2 = vector.broadcast %cst_1 : f32 to vector<8x128xf32>
    %cst_2 = arith.constant 0.000000e+00 : f32
    %3 = vector.broadcast %cst_2 : f32 to vector<8x128xf32>
    %c0 = arith.constant 0 : index
    %c0_3 = arith.constant 0 : index
    %c0_4 = arith.constant 0 : index
    %c0_5 = arith.constant 0 : index
    %4 = vector.load %arg3[%c0, %c0_3, %c0_4, %c0_5] : memref<1x1x32x128xi8, #tpu.memory_space<vmem>>, vector<1x1x32x128xi8>
    %5 = vector.shape_cast %4 : vector<1x1x32x128xi8> to vector<32x128xi8>
    %6 = arith.extsi %5 : vector<32x128xi8> to vector<32x128xi32>
    %c0_6 = arith.constant 0 : index
    %c0_7 = arith.constant 0 : index
    %c0_8 = arith.constant 0 : index
    %c0_9 = arith.constant 0 : index
    %7 = vector.load %arg2[%c0_6, %c0_7, %c0_8, %c0_9] : memref<1x4x32x128xf32, #tpu.memory_space<vmem>>, vector<1x1x32x128xf32>
    %8 = vector.shape_cast %7 : vector<1x1x32x128xf32> to vector<32x128xf32>
    %c0_10 = arith.constant 0 : index
    %c1 = arith.constant 1 : index
    %c0_11 = arith.constant 0 : index
    %c0_12 = arith.constant 0 : index
    %9 = vector.load %arg2[%c0_10, %c1, %c0_11, %c0_12] : memref<1x4x32x128xf32, #tpu.memory_space<vmem>>, vector<1x1x32x128xf32>
    %10 = vector.shape_cast %9 : vector<1x1x32x128xf32> to vector<32x128xf32>
    %c0_13 = arith.constant 0 : index
    %c2 = arith.constant 2 : index
    %c0_14 = arith.constant 0 : index
    %c0_15 = arith.constant 0 : index
    %11 = vector.load %arg2[%c0_13, %c2, %c0_14, %c0_15] : memref<1x4x32x128xf32, #tpu.memory_space<vmem>>, vector<1x1x32x128xf32>
    %12 = vector.shape_cast %11 : vector<1x1x32x128xf32> to vector<32x128xf32>
    %c0_16 = arith.constant 0 : index
    %c3 = arith.constant 3 : index
    %c0_17 = arith.constant 0 : index
    %c0_18 = arith.constant 0 : index
    %13 = vector.load %arg2[%c0_16, %c3, %c0_17, %c0_18] : memref<1x4x32x128xf32, #tpu.memory_space<vmem>>, vector<1x1x32x128xf32>
    %14 = vector.shape_cast %13 : vector<1x1x32x128xf32> to vector<32x128xf32>
    %15 = arith.maximumf %8, %10 : vector<32x128xf32>
    %16 = arith.maximumf %15, %12 : vector<32x128xf32>
    %17 = arith.maximumf %16, %14 : vector<32x128xf32>
    %cst_19 = arith.constant 0.000000e+00 : f32
    %18 = vector.broadcast %cst_19 : f32 to vector<32x128xf32>
    %cst_20 = arith.constant 0.000000e+00 : f32
    %19 = vector.broadcast %cst_20 : f32 to vector<32x128xf32>
    %20 = arith.subf %8, %17 : vector<32x128xf32>
    %21 = math.exp %20 : vector<32x128xf32>
    %22 = arith.addf %18, %21 : vector<32x128xf32>
    %c0_i32 = arith.constant 0 : i32
    %23 = vector.broadcast %c0_i32 : i32 to vector<32x128xi32>
    %24 = arith.cmpi eq, %6, %23 : vector<32x128xi32>
    %cst_21 = arith.constant 0.000000e+00 : f32
    %25 = vector.broadcast %cst_21 : f32 to vector<32x128xf32>
    %26 = arith.select %24, %20, %25 : vector<32x128xi1>, vector<32x128xf32>
    %27 = arith.addf %19, %26 : vector<32x128xf32>
    %28 = arith.subf %10, %17 : vector<32x128xf32>
    %29 = math.exp %28 : vector<32x128xf32>
    %30 = arith.addf %22, %29 : vector<32x128xf32>
    %c1_i32 = arith.constant 1 : i32
    %31 = vector.broadcast %c1_i32 : i32 to vector<32x128xi32>
    %32 = arith.cmpi eq, %6, %31 : vector<32x128xi32>
    %cst_22 = arith.constant 0.000000e+00 : f32
    %33 = vector.broadcast %cst_22 : f32 to vector<32x128xf32>
    %34 = arith.select %32, %28, %33 : vector<32x128xi1>, vector<32x128xf32>
    %35 = arith.addf %27, %34 : vector<32x128xf32>
    %36 = arith.subf %12, %17 : vector<32x128xf32>
    %37 = math.exp %36 : vector<32x128xf32>
    %38 = arith.addf %30, %37 : vector<32x128xf32>
    %c2_i32 = arith.constant 2 : i32
    %39 = vector.broadcast %c2_i32 : i32 to vector<32x128xi32>
    %40 = arith.cmpi eq, %6, %39 : vector<32x128xi32>
    %cst_23 = arith.constant 0.000000e+00 : f32
    %41 = vector.broadcast %cst_23 : f32 to vector<32x128xf32>
    %42 = arith.select %40, %36, %41 : vector<32x128xi1>, vector<32x128xf32>
    %43 = arith.addf %35, %42 : vector<32x128xf32>
    %44 = arith.subf %14, %17 : vector<32x128xf32>
    %45 = math.exp %44 : vector<32x128xf32>
    %46 = arith.addf %38, %45 : vector<32x128xf32>
    %c3_i32 = arith.constant 3 : i32
    %47 = vector.broadcast %c3_i32 : i32 to vector<32x128xi32>
    %48 = arith.cmpi eq, %6, %47 : vector<32x128xi32>
    %cst_24 = arith.constant 0.000000e+00 : f32
    %49 = vector.broadcast %cst_24 : f32 to vector<32x128xf32>
    %50 = arith.select %48, %44, %49 : vector<32x128xi1>, vector<32x128xf32>
    %51 = arith.addf %43, %50 : vector<32x128xf32>
    %52 = math.log %46 : vector<32x128xf32>
    %53 = arith.subf %52, %51 : vector<32x128xf32>
    %c0_i32_25 = arith.constant 0 : i32
    %54 = vector.broadcast %c0_i32_25 : i32 to vector<32x128xi32>
    %55 = arith.cmpi sge, %6, %54 : vector<32x128xi32>
    %cst_26 = arith.constant 0.000000e+00 : f32
    %56 = vector.broadcast %cst_26 : f32 to vector<32x128xf32>
    %57 = arith.select %55, %53, %56 : vector<32x128xi1>, vector<32x128xf32>
    %c0_27 = arith.constant 0 : index
    %c0_28 = arith.constant 0 : index
    %c0_29 = arith.constant 0 : index
    %c0_30 = arith.constant 0 : index
    %58 = vector.load %arg5[%c0_27, %c0_28, %c0_29, %c0_30] : memref<1x1x32x128xf32, #tpu.memory_space<vmem>>, vector<1x1x32x128xf32>
    %59 = vector.shape_cast %58 : vector<1x1x32x128xf32> to vector<32x128xf32>
    %60 = vector.shape_cast %57 : vector<32x128xf32> to vector<1x1x32x128xf32>
    tpu.vector_store %arg5[%c0_27, %c0_28, %c0_29, %c0_30], %60 {strides = array<i32>} : memref<1x1x32x128xf32, #tpu.memory_space<vmem>>, vector<1x1x32x128xf32>,
    %c0_i32_31 = arith.constant 0 : i32
    %61 = vector.broadcast %c0_i32_31 : i32 to vector<32x128xi32>
    %62 = arith.cmpi eq, %6, %61 : vector<32x128xi32>
    %c1_i32_32 = arith.constant 1 : i32
    %63 = vector.broadcast %c1_i32_32 : i32 to vector<32x128xi32>
    %64 = arith.cmpi eq, %6, %63 : vector<32x128xi32>
    %65 = arith.ori %62, %64 : vector<32x128xi1>
    %cst_33 = arith.constant 0.000000e+00 : f32
    %66 = vector.broadcast %cst_33 : f32 to vector<32x128xf32>
    %67 = arith.select %65, %57, %66 : vector<32x128xi1>, vector<32x128xf32>
    %cst_34 = arith.constant 0.000000e+00 : f32
    %68 = vector.broadcast %cst_34 : f32 to vector<32x128xf32>
    %c0_35 = arith.constant 0 : index
    %c0_36 = arith.constant 0 : index
    %c0_37 = arith.constant 0 : index
    %c0_38 = arith.constant 0 : index
    %69 = vector.load %arg4[%c0_35, %c0_36, %c0_37, %c0_38] : memref<1x2x32x128xf32, #tpu.memory_space<vmem>>, vector<1x1x32x128xf32>
    %70 = vector.shape_cast %69 : vector<1x1x32x128xf32> to vector<32x128xf32>
    %c2_i32_39 = arith.constant 2 : i32
    %71 = vector.broadcast %c2_i32_39 : i32 to vector<32x128xi32>
    %72 = arith.cmpi eq, %6, %71 : vector<32x128xi32>
    %cst_40 = arith.constant 1.000000e+00 : f32
    %cst_41 = arith.constant 0.000000e+00 : f32
    %73 = vector.broadcast %cst_40 : f32 to vector<32x128xf32>
    %74 = vector.broadcast %cst_41 : f32 to vector<32x128xf32>
    %75 = arith.select %72, %73, %74 : vector<32x128xi1>, vector<32x128xf32>
    %76 = arith.mulf %70, %75 : vector<32x128xf32>
    %c0_42 = arith.constant 0 : index
    %c0_43 = arith.constant 0 : index
    %c0_44 = arith.constant 0 : index
    %c0_45 = arith.constant 0 : index
    %77 = vector.load %arg6[%c0_42, %c0_43, %c0_44, %c0_45] : memref<1x2x32x128xf32, #tpu.memory_space<vmem>>, vector<1x1x32x128xf32>
    %78 = vector.shape_cast %77 : vector<1x1x32x128xf32> to vector<32x128xf32>
    %79 = vector.shape_cast %76 : vector<32x128xf32> to vector<1x1x32x128xf32>
    tpu.vector_store %arg6[%c0_42, %c0_43, %c0_44, %c0_45], %79 {strides = array<i32>} : memref<1x2x32x128xf32, #tpu.memory_space<vmem>>, vector<1x1x32x128xf32>,
    %80 = arith.subf %70, %75 : vector<32x128xf32>
    %81 = arith.subf %70, %75 : vector<32x128xf32>
    %82 = arith.mulf %80, %81 : vector<32x128xf32>
    %83 = arith.addf %68, %82 : vector<32x128xf32>
    %c0_46 = arith.constant 0 : index
    %c1_47 = arith.constant 1 : index
    %c0_48 = arith.constant 0 : index
    %c0_49 = arith.constant 0 : index
    %84 = vector.load %arg4[%c0_46, %c1_47, %c0_48, %c0_49] : memref<1x2x32x128xf32, #tpu.memory_space<vmem>>, vector<1x1x32x128xf32>
    %85 = vector.shape_cast %84 : vector<1x1x32x128xf32> to vector<32x128xf32>
    %c3_i32_50 = arith.constant 3 : i32
    %86 = vector.broadcast %c3_i32_50 : i32 to vector<32x128xi32>
    %87 = arith.cmpi eq, %6, %86 : vector<32x128xi32>
    %cst_51 = arith.constant 1.000000e+00 : f32
    %cst_52 = arith.constant 0.000000e+00 : f32
    %88 = vector.broadcast %cst_51 : f32 to vector<32x128xf32>
    %89 = vector.broadcast %cst_52 : f32 to vector<32x128xf32>
    %90 = arith.select %87, %88, %89 : vector<32x128xi1>, vector<32x128xf32>
    %91 = arith.mulf %85, %90 : vector<32x128xf32>
    %c0_53 = arith.constant 0 : index
    %c1_54 = arith.constant 1 : index
    %c0_55 = arith.constant 0 : index
    %c0_56 = arith.constant 0 : index
    %92 = vector.load %arg6[%c0_53, %c1_54, %c0_55, %c0_56] : memref<1x2x32x128xf32, #tpu.memory_space<vmem>>, vector<1x1x32x128xf32>
    %93 = vector.shape_cast %92 : vector<1x1x32x128xf32> to vector<32x128xf32>
    %94 = vector.shape_cast %91 : vector<32x128xf32> to vector<1x1x32x128xf32>
    tpu.vector_store %arg6[%c0_53, %c1_54, %c0_55, %c0_56], %94 {strides = array<i32>} : memref<1x2x32x128xf32, #tpu.memory_space<vmem>>, vector<1x1x32x128xf32>,
    %95 = arith.subf %85, %90 : vector<32x128xf32>
    %96 = arith.subf %85, %90 : vector<32x128xf32>
    %97 = arith.mulf %95, %96 : vector<32x128xf32>
    %98 = arith.addf %83, %97 : vector<32x128xf32>
    %99 = vector.shape_cast %67 : vector<32x128xf32> to vector<4x8x128xf32>
    %cst_57 = arith.constant dense<0.000000e+00> : vector<8x128xf32>
    %100 = vector.multi_reduction <add>, %99, %cst_57 [0] : vector<4x8x128xf32> to vector<8x128xf32>
    %101 = arith.addf %0, %100 : vector<8x128xf32>
    %102 = vector.shape_cast %98 : vector<32x128xf32> to vector<4x8x128xf32>
    %cst_58 = arith.constant dense<0.000000e+00> : vector<8x128xf32>
    %103 = vector.multi_reduction <add>, %102, %cst_58 [0] : vector<4x8x128xf32> to vector<8x128xf32>
    %104 = arith.addf %1, %103 : vector<8x128xf32>
    %105 = vector.shape_cast %75 : vector<32x128xf32> to vector<4x8x128xf32>
    %cst_59 = arith.constant dense<0.000000e+00> : vector<8x128xf32>
    %106 = vector.multi_reduction <add>, %105, %cst_59 [0] : vector<4x8x128xf32> to vector<8x128xf32>
    %107 = arith.addf %2, %106 : vector<8x128xf32>
    %108 = vector.shape_cast %90 : vector<32x128xf32> to vector<4x8x128xf32>
    %cst_60 = arith.constant dense<0.000000e+00> : vector<8x128xf32>
    %109 = vector.multi_reduction <add>, %108, %cst_60 [0] : vector<4x8x128xf32> to vector<8x128xf32>
    %110 = arith.addf %3, %109 : vector<8x128xf32>
    %111 = tpu.concatenate %101, %107, %110, %104 in 0 : vector<8x128xf32>, vector<8x128xf32>, vector<8x128xf32>, vector<8x128xf32> -> vector<32x128xf32>
    %c0_61 = arith.constant 0 : index
    %c0_62 = arith.constant 0 : index
    %c0_63 = arith.constant 0 : index
    %c0_64 = arith.constant 0 : index
    %112 = vector.load %arg7[%c0_61, %c0_62, %c0_63, %c0_64] : memref<1x1x32x128xf32, #tpu.memory_space<vmem>>, vector<1x1x32x128xf32>
    %113 = vector.shape_cast %112 : vector<1x1x32x128xf32> to vector<32x128xf32>
    %114 = vector.shape_cast %111 : vector<32x128xf32> to vector<1x1x32x128xf32>
    tpu.vector_store %arg7[%c0_61, %c0_62, %c0_63, %c0_64], %114 {strides = array<i32>} : memref<1x1x32x128xf32, #tpu.memory_space<vmem>>, vector<1x1x32x128xf32>,
    return
  }
  func.func @transform_0(%arg0: i32, %arg1: i32) -> (i32, i32, i32, i32) {
    %c0_i32 = arith.constant 0 : i32
    %c0_i32_0 = arith.constant 0 : i32
    %c0_i32_1 = arith.constant 0 : i32
    return %arg0, %c0_i32, %arg1, %c0_i32_0 : i32, i32, i32, i32
  }
  func.func @transform_1(%arg0: i32, %arg1: i32) -> (i32, i32, i32, i32) {
    %c0_i32 = arith.constant 0 : i32
    %c0_i32_0 = arith.constant 0 : i32
    %c0_i32_1 = arith.constant 0 : i32
    return %arg0, %c0_i32, %arg1, %c0_i32_0 : i32, i32, i32, i32
  }
  func.func @transform_2(%arg0: i32, %arg1: i32) -> (i32, i32, i32, i32) {
    %c0_i32 = arith.constant 0 : i32
    %c0_i32_0 = arith.constant 0 : i32
    %c0_i32_1 = arith.constant 0 : i32
    return %arg0, %c0_i32, %arg1, %c0_i32_0 : i32, i32, i32, i32
  }
  func.func @transform_3(%arg0: i32, %arg1: i32) -> (i32, i32, i32, i32) {
    %c0_i32 = arith.constant 0 : i32
    %c0_i32_0 = arith.constant 0 : i32
    %c0_i32_1 = arith.constant 0 : i32
    return %arg0, %c0_i32, %arg1, %c0_i32_0 : i32, i32, i32, i32
  }
  func.func @transform_4(%arg0: i32, %arg1: i32) -> (i32, i32, i32, i32) {
    %c0_i32 = arith.constant 0 : i32
    %c0_i32_0 = arith.constant 0 : i32
    %c0_i32_1 = arith.constant 0 : i32
    return %arg0, %c0_i32, %arg1, %c0_i32_0 : i32, i32, i32, i32
  }
  func.func @transform_5(%arg0: i32, %arg1: i32) -> (i32, i32, i32, i32) {
    %c0_i32 = arith.constant 0 : i32
    %c0_i32_0 = arith.constant 0 : i32
    %c0_i32_1 = arith.constant 0 : i32
    return %arg0, %arg1, %c0_i32, %c0_i32_0 : i32, i32, i32, i32
  }
}

</mosaic_0001>

<llo_original>
// kernel: tpu_custom_call.1
$region0: #{tpu_custom_call.1}
  #allocation0 [shape = 'u32[]', space=smem, size = 0x4, offset = 0x4, fixed_abs, tag = 'smem constant byte address 0x4 - core index']
  #allocation1 [shape = 'u32[144,128]{1,0:T(1,128)}', space=vmem, size = 0x12000, scoped, tag = 'internal scratch']
  %s0 = inlined_call_operand.hbm [shape: f32[2,4,32,128], index: 0, kind: input, shape index: {}]
  %s1 = inlined_call_operand.hbm [shape: s8[2,1,32,128], index: 1, kind: input, shape index: {}]
  %s2 = inlined_call_operand.hbm [shape: f32[2,2,32,128], index: 2, kind: input, shape index: {}]
  %s3 = inlined_call_operand.hbm [shape: f32[2,1,32,128], index: 3, kind: output, shape index: {0}]
  %s4 = inlined_call_operand.hbm [shape: f32[2,2,32,128], index: 4, kind: output, shape index: {1}]
  %s5 = inlined_call_operand.hbm [shape: f32[2,1,32,128], index: 5, kind: output, shape index: {2}]
  %6 = xla_tuple %s3, %s4, %s5
  %s7 = sld [smem:[#allocation0]]
  $region73: #{tpu_custom_call.1} parent=0
    _
  %s9 = ssub.s32 1, %s7
  %s10 = scalar_select 0, %s9, %s7
  $region1: #{tpu_custom_call.1} parent=0
    #allocation2 [shape = 'u8[131072]{0}', space=vmem, size = 0x20000, scoped, tag = 'input window, operand 0']
    #allocation3 [shape = 's32[2]{0}', space=sflag, size = 0x8, scoped, tag = 'scoped memory for tpu_custom_call.1']
    #allocation4 [shape = 's32[2]{0}', space=sflag, size = 0x8, scoped, tag = 'scoped memory for tpu_custom_call.1']
    #allocation5 [shape = 'u8[8192]{0}', space=vmem, size = 0x2000, scoped, tag = 'input window, operand 1']
    #allocation6 [shape = 's32[2]{0}', space=sflag, size = 0x8, scoped, tag = 'scoped memory for tpu_custom_call.1']
    #allocation7 [shape = 'u8[65536]{0}', space=vmem, size = 0x10000, scoped, tag = 'input window, operand 2']
    #allocation8 [shape = 'u8[32768]{0}', space=vmem, size = 0x8000, scoped, tag = 'output window, operand 0']
    #allocation9 [shape = 'u8[65536]{0}', space=vmem, size = 0x10000, scoped, tag = 'output window, operand 1']
    #allocation10 [shape = 's32[2]{0}', space=sflag, size = 0x8, scoped, tag = 'scoped memory for tpu_custom_call.1']
    #allocation11 [shape = 'u8[32768]{0}', space=vmem, size = 0x8000, scoped, tag = 'output window, operand 2']
    %11 = vsyncpa [#allocation3], 0
    %s12 = scalar_lea.sflag [#allocation3], 1
    %13 = vsyncpa %s12, 0
    %14 = vsyncpa [#allocation6], 0
    %s15 = scalar_lea.sflag [#allocation6], 1
    %16 = vsyncpa %s15, 0
    %17 = vsyncpa [#allocation4], 0
    %s18 = scalar_lea.sflag [#allocation4], 1
    %19 = vsyncpa %s18, 0
    %20 = vsyncpa [#allocation10], 0
    %s21 = scalar_lea.sflag [#allocation10], 1
    %22 = vsyncpa %s21, 0
    loop: start=0, step=1, limit=4
    $region2: #{tpu_custom_call.1} parent=1 // loop_pre_header
      _
    $region3: #{tpu_custom_call.1} parent=1 // loop_header
      %s24 = sphi 0, %s28
      %p25 = scmp.ge.s32.totalorder %s24, 4
      %s31 = sphi 0, %s43
      %s32 = sphi 0, %s39
      %s33 = sphi 0, %s31
      %s34 = sphi 0, %s32
      %s35 = sphi 0, %s33
      %s36 = sphi 0, %s34
      %s48 = sphi 0, %s50
      %s51 = sphi 0, %s48
      %s52 = sphi 0, %s51
      %s68 = sphi 0, %s52
      %s76 = sphi 0, %s78
      %s79 = sphi 0, %s76
      %s80 = sphi 0, %s79
      %s96 = sphi 0, %s80
      %s104 = sphi 0, %s106
      %s107 = sphi 0, %s104
      %s108 = sphi 0, %s107
      %s124 = sphi 0, %s108
      %s132 = sphi 0, %s134
      %s135 = sphi 0, %s132
      %s136 = sphi 0, %s135
      %s152 = sphi 0, %s136
      %s160 = sphi 0, %s162
      %s163 = sphi 0, %s160
      %s164 = sphi 0, %s163
      %s180 = sphi 0, %s164
      %s188 = sphi 0, %s190
      %s191 = sphi 0, %s188
      %s192 = sphi 0, %s191
      %s208 = sphi 0, %s192
    $region4: #{tpu_custom_call.1} parent=1 // loop_header_branch
      %27 = sbr.rel (%p25) target = $region8
    $region5: #{tpu_custom_call.1} parent=1 // loop_body
      %s29 = ssub.s32 %s24, 1
      %s30 = ssub.s32 %s24, 2
      %s37 = sadd.s32 1, %s32
      %p38 = scmp.ge.s32.totalorder %s37, 1
      %s39 = scalar_select %p38, 0, %s37
      %s40 = sadd.s32 1, %s31
      %s41 = scalar_select %p38, %s40, %s31
      %p42 = scmp.ge.s32.totalorder %s41, 2
      %s43 = scalar_select %p42, 0, %s41
      %s44 = ssub.s32 %s31, %s43
      %s45 = ssub.s32 %s32, %s39
      %s46 = sor.u32 %s44, %s45
      %p47 = scmp.eq.s32.totalorder %s46, 0
      %s49 = sadd.s32 %s48, 1
      %s50 = scalar_select %p47, %s48, %s49
      %p53 = pneg %p47
      %p54 = scmp.eq.s32.totalorder %s24, 1
      %p55 = por %p53, %p54
      %p56 = scmp.ne.s32.totalorder %s48, %s51
      %p57 = scmp.eq.s32.totalorder %s24, 0
      %p58 = por %p56, %p57
      %p59 = scmp.ne.s32.totalorder %s48, %s51
      %p60 = scmp.eq.s32.totalorder %s29, 1
      %p61 = por %p59, %p60
      %p62 = scmp.ne.s32.totalorder %s51, %s52
      %p63 = scmp.eq.s32.totalorder %s29, 0
      %p64 = por %p62, %p63
      %p65 = scmp.ne.s32.totalorder %s51, %s52
      %p66 = scmp.eq.s32.totalorder %s30, 1
      %p67 = por %p65, %p66
      %p69 = scmp.ne.s32.totalorder %s52, %s68
      %p70 = scmp.eq.s32.totalorder %s30, 0
      %p71 = por %p69, %p70
      %s72 = ssub.s32 %s31, %s43
      %s73 = ssub.s32 %s32, %s39
      %s74 = sor.u32 %s72, %s73
      %p75 = scmp.eq.s32.totalorder %s74, 0
      %s77 = sadd.s32 %s76, 1
      %s78 = scalar_select %p75, %s76, %s77
      %p81 = pneg %p75
      %p82 = scmp.eq.s32.totalorder %s24, 1
      %p83 = por %p81, %p82
      %p84 = scmp.ne.s32.totalorder %s76, %s79
      %p85 = scmp.eq.s32.totalorder %s24, 0
      %p86 = por %p84, %p85
      %p87 = scmp.ne.s32.totalorder %s76, %s79
      %p88 = scmp.eq.s32.totalorder %s29, 1
      %p89 = por %p87, %p88
      %p90 = scmp.ne.s32.totalorder %s79, %s80
      %p91 = scmp.eq.s32.totalorder %s29, 0
      %p92 = por %p90, %p91
      %p93 = scmp.ne.s32.totalorder %s79, %s80
      %p94 = scmp.eq.s32.totalorder %s30, 1
      %p95 = por %p93, %p94
      %p97 = scmp.ne.s32.totalorder %s80, %s96
      %p98 = scmp.eq.s32.totalorder %s30, 0
      %p99 = por %p97, %p98
      %s100 = ssub.s32 %s31, %s43
      %s101 = ssub.s32 %s32, %s39
      %s102 = sor.u32 %s100, %s101
      %p103 = scmp.eq.s32.totalorder %s102, 0
      %s105 = sadd.s32 %s104, 1
      %s106 = scalar_select %p103, %s104, %s105
      %p109 = pneg %p103
      %p110 = scmp.eq.s32.totalorder %s24, 1
      %p111 = por %p109, %p110
      %p112 = scmp.ne.s32.totalorder %s104, %s107
      %p113 = scmp.eq.s32.totalorder %s24, 0
      %p114 = por %p112, %p113
      %p115 = scmp.ne.s32.totalorder %s104, %s107
      %p116 = scmp.eq.s32.totalorder %s29, 1
      %p117 = por %p115, %p116
      %p118 = scmp.ne.s32.totalorder %s107, %s108
      %p119 = scmp.eq.s32.totalorder %s29, 0
      %p120 = por %p118, %p119
      %p121 = scmp.ne.s32.totalorder %s107, %s108
      %p122 = scmp.eq.s32.totalorder %s30, 1
      %p123 = por %p121, %p122
      %p125 = scmp.ne.s32.totalorder %s108, %s124
      %p126 = scmp.eq.s32.totalorder %s30, 0
      %p127 = por %p125, %p126
      %s128 = ssub.s32 %s31, %s43
      %s129 = ssub.s32 %s32, %s39
      %s130 = sor.u32 %s128, %s129
      %p131 = scmp.eq.s32.totalorder %s130, 0
      %s133 = sadd.s32 %s132, 1
      %s134 = scalar_select %p131, %s132, %s133
      %p137 = pneg %p131
      %p138 = scmp.eq.s32.totalorder %s24, 1
      %p139 = por %p137, %p138
      %p140 = scmp.ne.s32.totalorder %s132, %s135
      %p141 = scmp.eq.s32.totalorder %s24, 0
      %p142 = por %p140, %p141
      %p143 = scmp.ne.s32.totalorder %s132, %s135
      %p144 = scmp.eq.s32.totalorder %s29, 1
      %p145 = por %p143, %p144
      %p146 = scmp.ne.s32.totalorder %s135, %s136
      %p147 = scmp.eq.s32.totalorder %s29, 0
      %p148 = por %p146, %p147
      %p149 = scmp.ne.s32.totalorder %s135, %s136
      %p150 = scmp.eq.s32.totalorder %s30, 1
      %p151 = por %p149, %p150
      %p153 = scmp.ne.s32.totalorder %s136, %s152
      %p154 = scmp.eq.s32.totalorder %s30, 0
      %p155 = por %p153, %p154
      %s156 = ssub.s32 %s31, %s43
      %s157 = ssub.s32 %s32, %s39
      %s158 = sor.u32 %s156, %s157
      %p159 = scmp.eq.s32.totalorder %s158, 0
      %s161 = sadd.s32 %s160, 1
      %s162 = scalar_select %p159, %s160, %s161
      %p165 = pneg %p159
      %p166 = scmp.eq.s32.totalorder %s24, 1
      %p167 = por %p165, %p166
      %p168 = scmp.ne.s32.totalorder %s160, %s163
      %p169 = scmp.eq.s32.totalorder %s24, 0
      %p170 = por %p168, %p169
      %p171 = scmp.ne.s32.totalorder %s160, %s163
      %p172 = scmp.eq.s32.totalorder %s29, 1
      %p173 = por %p171, %p172
      %p174 = scmp.ne.s32.totalorder %s163, %s164
      %p175 = scmp.eq.s32.totalorder %s29, 0
      %p176 = por %p174, %p175
      %p177 = scmp.ne.s32.totalorder %s163, %s164
      %p178 = scmp.eq.s32.totalorder %s30, 1
      %p179 = por %p177, %p178
      %p181 = scmp.ne.s32.totalorder %s164, %s180
      %p182 = scmp.eq.s32.totalorder %s30, 0
      %p183 = por %p181, %p182
      %s184 = ssub.s32 %s31, %s43
      %s185 = ssub.s32 %s32, %s39
      %s186 = sor.u32 %s184, %s185
      %p187 = scmp.eq.s32.totalorder %s186, 0
      %s189 = sadd.s32 %s188, 1
      %s190 = scalar_select %p187, %s188, %s189
      %p193 = pneg %p187
      %p194 = scmp.eq.s32.totalorder %s24, 1
      %p195 = por %p193, %p194
      %p196 = scmp.ne.s32.totalorder %s188, %s191
      %p197 = scmp.eq.s32.totalorder %s24, 0
      %p198 = por %p196, %p197
      %p199 = scmp.ne.s32.totalorder %s188, %s191
      %p200 = scmp.eq.s32.totalorder %s29, 1
      %p201 = por %p199, %p200
      %p202 = scmp.ne.s32.totalorder %s191, %s192
      %p203 = scmp.eq.s32.totalorder %s29, 0
      %p204 = por %p202, %p203
      %p205 = scmp.ne.s32.totalorder %s191, %s192
      %p206 = scmp.eq.s32.totalorder %s30, 1
      %p207 = por %p205, %p206
      %p209 = scmp.ne.s32.totalorder %s192, %s208
      %p210 = scmp.eq.s32.totalorder %s30, 0
      %p211 = por %p209, %p210
      %p212 = scmp.le.s32.totalorder 1, %s24
      %p213 = scmp.lt.s32.totalorder %s24, 3
      %p214 = pnand %p212, %p213
      %p215 = pneg %p214
      // Predicated region
      $region9: #{tpu_custom_call.1} parent=5 // pred_check
        _
      $region10: #{tpu_custom_call.1} parent=5 // pred_check_branch
        %217 = sbr.rel (%p214) target = $region12
      $region11: #{tpu_custom_call.1} parent=5 // pred_region
        %s218 = ssub.s32 %s24, 1
      $region12: #{tpu_custom_call.1} parent=5 // pred_fallthru
        _
      %p219 = scmp.lt.s32.totalorder %s24, 2
      // Predicated region
      $region13: #{tpu_custom_call.1} parent=5 // pred_check
        %p220 = pneg %p219
      $region14: #{tpu_custom_call.1} parent=5 // pred_check_branch
        %222 = sbr.rel (%p220) target = $region16
      $region15: #{tpu_custom_call.1} parent=5 // pred_region
        // Predicated region
        $region17: #{tpu_custom_call.1} parent=15 // pred_check
          %p223 = pneg %p58
        $region18: #{tpu_custom_call.1} parent=15 // pred_check_branch
          %225 = sbr.rel (%p223) target = $region20
        $region19: #{tpu_custom_call.1} parent=15 // pred_region
          %s226 = sand.u32 %s48, 1
          %s227 = scalar_lea.sflag [#allocation3], %s226
          %s228 = sand.u32 %s48, 1
          %s229 = smul.addr %s228, 128
          %s230 = scalar_lea.vmem [#allocation2], %s229
          %s231 = smul.u32 4, %s32
          %s233 = ssub.s32 2048, 2048
          %234 = vsyncadd %s227, %s233
          %s235 = smul.addr %s31, 16
          %s236 = sadd.s32 %s231, %s235
          %s237 = smul.addr %s236, 128
          %s238 = scalar_lea.hbm %s0, %s237
          %s239 = sshll.u32 %s230, 4
          %s240 = int_to_ptr.vmem [resolvable:$true] %s239
          %245 = dma.hbm_to_vmem [thread:$0]  %s238, 2048, %s240, %s227, 128, 128, 8
        $region20: #{tpu_custom_call.1} parent=15 // pred_fallthru
          _
        // Predicated region
        $region21: #{tpu_custom_call.1} parent=15 // pred_check
          %p246 = pneg %p86
        $region22: #{tpu_custom_call.1} parent=15 // pred_check_branch
          %248 = sbr.rel (%p246) target = $region24
        $region23: #{tpu_custom_call.1} parent=15 // pred_region
          %s249 = sand.u32 %s24, 1
          %s250 = scalar_lea.sflag [#allocation6], %s249
          %s251 = sand.u32 %s76, 1
          %s252 = smul.addr %s251, 8
          %s253 = scalar_lea.vmem [#allocation5], %s252
          %s255 = ssub.s32 128, 128
          %256 = vsyncadd %s250, %s255
          %s257 = sadd.s32 %s32, %s31
          %s258 = smul.addr %s257, 128
          %s259 = scalar_lea.hbm %s1, %s258
          %s261 = sshll.u32 %s253, 4
          %s262 = int_to_ptr.vmem [resolvable:$true] %s261
          %264 = dma.hbm_to_vmem [thread:$0]  %s259, 128, %s262, %s250
        $region24: #{tpu_custom_call.1} parent=15 // pred_fallthru
          _
        // Predicated region
        $region25: #{tpu_custom_call.1} parent=15 // pred_check
          %p265 = pneg %p114
        $region26: #{tpu_custom_call.1} parent=15 // pred_check_branch
          %267 = sbr.rel (%p265) target = $region28
        $region27: #{tpu_custom_call.1} parent=15 // pred_region
          %s268 = sand.u32 %s24, 1
          %s269 = scalar_lea.sflag [#allocation6], %s268
          %s270 = sand.u32 %s104, 1
          %s271 = smul.addr %s270, 64
          %s272 = scalar_lea.vmem [#allocation7], %s271
          %s273 = smul.u32 4, %s32
          %s275 = ssub.s32 1024, 1024
          %276 = vsyncadd %s269, %s275
          %s277 = smul.addr %s31, 8
          %s278 = sadd.s32 %s273, %s277
          %s279 = smul.addr %s278, 128
          %s280 = scalar_lea.hbm %s2, %s279
          %s281 = sshll.u32 %s272, 4
          %s282 = int_to_ptr.vmem [resolvable:$true] %s281
          %287 = dma.hbm_to_vmem [thread:$0]  %s280, 1024, %s282, %s269, 128, 128, 8
        $region28: #{tpu_custom_call.1} parent=15 // pred_fallthru
          _
      $region16: #{tpu_custom_call.1} parent=5 // pred_fallthru
        _
      %p288 = scmp.le.s32.totalorder 1, %s24
      %p289 = scmp.lt.s32.totalorder %s24, 3
      %p290 = pnand %p288, %p289
      %p291 = pneg %p290
      // Predicated region
      $region29: #{tpu_custom_call.1} parent=5 // pred_check
        _
      $region30: #{tpu_custom_call.1} parent=5 // pred_check_branch
        %293 = sbr.rel (%p290) target = $region32
      $region31: #{tpu_custom_call.1} parent=5 // pred_region
        %s294 = ssub.s32 %s24, 1
        %s295 = sand.u32 %s51, 1
        %s296 = scalar_lea.sflag [#allocation3], %s295
        %s297 = sand.u32 %s51, 1
        %s298 = smul.addr %s297, 128
        %s299 = scalar_lea.vmem [#allocation2], %s298
        // Predicated region
        $region33: #{tpu_custom_call.1} parent=31 // pred_check
          %p300 = pneg %p64
        $region34: #{tpu_custom_call.1} parent=31 // pred_check_branch
          %302 = sbr.rel (%p300) target = $region36
        $region35: #{tpu_custom_call.1} parent=31 // pred_region
          %303 = dma.done %s296, 2048
        $region36: #{tpu_custom_call.1} parent=31 // pred_fallthru
          _
        %s304 = sand.u32 %s29, 1
        %s305 = scalar_lea.sflag [#allocation6], %s304
        %s306 = sand.u32 %s79, 1
        %s307 = smul.addr %s306, 8
        %s308 = scalar_lea.vmem [#allocation5], %s307
        // Predicated region
        $region37: #{tpu_custom_call.1} parent=31 // pred_check
          %p309 = pneg %p92
        $region38: #{tpu_custom_call.1} parent=31 // pred_check_branch
          %311 = sbr.rel (%p309) target = $region40
        $region39: #{tpu_custom_call.1} parent=31 // pred_region
          %312 = dma.done %s305, 128
        $region40: #{tpu_custom_call.1} parent=31 // pred_fallthru
          _
        %s313 = sand.u32 %s29, 1
        %s314 = scalar_lea.sflag [#allocation6], %s313
        %s315 = sand.u32 %s107, 1
        %s316 = smul.addr %s315, 64
        %s317 = scalar_lea.vmem [#allocation7], %s316
        // Predicated region
        $region41: #{tpu_custom_call.1} parent=31 // pred_check
          %p318 = pneg %p120
        $region42: #{tpu_custom_call.1} parent=31 // pred_check_branch
          %320 = sbr.rel (%p318) target = $region44
        $region43: #{tpu_custom_call.1} parent=31 // pred_region
          %321 = dma.done %s314, 1024
        $region44: #{tpu_custom_call.1} parent=31 // pred_fallthru
          _
        %s322 = sand.u32 %s51, 1
        %s323 = scalar_lea.sflag [#allocation3], %s322
        %s324 = sand.u32 %s51, 1
        %s325 = smul.addr %s324, 128
        %s326 = scalar_lea.vmem [#allocation2], %s325
        %p327 = pneg %p64
        %p328 = pneg %p61
        %s329 = sand.u32 %s29, 1
        %s330 = scalar_lea.sflag [#allocation6], %s329
        %s331 = sand.u32 %s79, 1
        %s332 = smul.addr %s331, 8
        %s333 = scalar_lea.vmem [#allocation5], %s332
        %p334 = pneg %p92
        %p335 = pneg %p89
        %s336 = sand.u32 %s29, 1
        %s337 = scalar_lea.sflag [#allocation6], %s336
        %s338 = sand.u32 %s107, 1
        %s339 = smul.addr %s338, 64
        %s340 = scalar_lea.vmem [#allocation7], %s339
        %p341 = pneg %p120
        %p342 = pneg %p117
        %p343 = pneg %p148
        %p344 = pneg %p145
        %s345 = sand.u32 %s135, 1
        %s346 = scalar_lea.sflag [#allocation4], %s345
        %s347 = sand.u32 %s135, 1
        %s348 = smul.addr %s347, 32
        %s349 = scalar_lea.vmem [#allocation8], %s348
        %p350 = pneg %p176
        %p351 = pneg %p173
        %s352 = sand.u32 %s29, 1
        %s353 = scalar_lea.sflag [#allocation10], %s352
        %s354 = sand.u32 %s163, 1
        %s355 = smul.addr %s354, 64
        %s356 = scalar_lea.vmem [#allocation9], %s355
        %p357 = pneg %p204
        %p358 = pneg %p201
        %s359 = sand.u32 %s29, 1
        %s360 = scalar_lea.sflag [#allocation10], %s359
        %s361 = sand.u32 %s191, 1
        %s362 = smul.addr %s361, 32
        %s363 = scalar_lea.vmem [#allocation11], %s362
        %s364 = smul.u32 4, %s34
        %s365 = smul.u32 4, %s34
        %s366 = smul.u32 4, %s34
        %s367 = smul.u32 4, %s34
        %v368 = vld [vmem:[%s308] sm:$0xff]
        %v369 = vunpack.c.0.s8 %v368
        %v370 = vunpack.c.1.s8 %v368
        %v371 = vunpack.c.2.s8 %v368
        %v372 = vunpack.c.3.s8 %v368
        %v373 = vld [vmem:[%s299] sm:$0xff]
        %v374 = vld [vmem:[%s299 + $0x8] sm:$0xff]
        %v375 = vld [vmem:[%s299 + $0x10] sm:$0xff]
        %v376 = vld [vmem:[%s299 + $0x18] sm:$0xff]
        %s377 = scalar_lea.vmem %s299, 32 [#allocation2]
        %v378 = vld [vmem:[%s377] sm:$0xff]
        %v379 = vld [vmem:[%s377 + $0x8] sm:$0xff]
        %v380 = vld [vmem:[%s377 + $0x10] sm:$0xff]
        %v381 = vld [vmem:[%s377 + $0x18] sm:$0xff]
        %s382 = scalar_lea.vmem %s299, 64 [#allocation2]
        %v383 = vld [vmem:[%s382] sm:$0xff]
        %v384 = vld [vmem:[%s382 + $0x8] sm:$0xff]
        %v385 = vld [vmem:[%s382 + $0x10] sm:$0xff]
        %v386 = vld [vmem:[%s382 + $0x18] sm:$0xff]
        %s387 = scalar_lea.vmem %s299, 96 [#allocation2]
        %v388 = vld [vmem:[%s387] sm:$0xff]
        %v389 = vld [vmem:[%s387 + $0x8] sm:$0xff]
        %v390 = vld [vmem:[%s387 + $0x10] sm:$0xff]
        %v391 = vld [vmem:[%s387 + $0x18] sm:$0xff]
        %v392 = vmax.f32 %v373, %v378
        %v393 = vmax.f32 %v374, %v379
        %v394 = vmax.f32 %v375, %v380
        %v395 = vmax.f32 %v376, %v381
        %v396 = vmax.f32 %v392, %v383
        %v397 = vmax.f32 %v393, %v384
        %v398 = vmax.f32 %v394, %v385
        %v399 = vmax.f32 %v395, %v386
        %v400 = vmax.f32 %v396, %v388
        %v401 = vmax.f32 %v397, %v389
        %v402 = vmax.f32 %v398, %v390
        %v403 = vmax.f32 %v399, %v391
        %v404 = vsub.f32 %v373, %v400
        %v405 = vsub.f32 %v374, %v401
        %v406 = vsub.f32 %v375, %v402
        %v407 = vsub.f32 %v376, %v403
        %v408 = vmul.f32 %v404, 1.442695
        %v409 = vpow.pop %v408
        %v410 = vmul.f32 %v405, 1.442695
        %v411 = vpow.pop %v410
        %v412 = vmul.f32 %v406, 1.442695
        %v413 = vpow.pop %v412
        %v414 = vmul.f32 %v407, 1.442695
        %v415 = vpow.pop %v414
        %v416 = vadd.f32 %v409, 0.0
        %v417 = vadd.f32 %v411, 0.0
        %v418 = vadd.f32 %v413, 0.0
        %v419 = vadd.f32 %v415, 0.0
        %vm420 = vcmp.eq.s32.totalorder %v369, 0
        %vm421 = vcmp.eq.s32.totalorder %v370, 0
        %vm422 = vcmp.eq.s32.totalorder %v371, 0
        %vm423 = vcmp.eq.s32.totalorder %v372, 0
        %v424 = vsel %vm420, %v404, 0.0
        %v425 = vsel %vm421, %v405, 0.0
        %v426 = vsel %vm422, %v406, 0.0
        %v427 = vsel %vm423, %v407, 0.0
        %v428 = vadd.f32 %v424, 0.0
        %v429 = vadd.f32 %v425, 0.0
        %v430 = vadd.f32 %v426, 0.0
        %v431 = vadd.f32 %v427, 0.0
        %v432 = vsub.f32 %v378, %v400
        %v433 = vsub.f32 %v379, %v401
        %v434 = vsub.f32 %v380, %v402
        %v435 = vsub.f32 %v381, %v403
        %v436 = vmul.f32 %v432, 1.442695
        %v437 = vpow.pop %v436
        %v438 = vmul.f32 %v433, 1.442695
        %v439 = vpow.pop %v438
        %v440 = vmul.f32 %v434, 1.442695
        %v441 = vpow.pop %v440
        %v442 = vmul.f32 %v435, 1.442695
        %v443 = vpow.pop %v442
        %v444 = vadd.f32 %v416, %v437
        %v445 = vadd.f32 %v417, %v439
        %v446 = vadd.f32 %v418, %v441
        %v447 = vadd.f32 %v419, %v443
        %vm448 = vcmp.eq.s32.totalorder %v369, 1
        %vm449 = vcmp.eq.s32.totalorder %v370, 1
        %vm450 = vcmp.eq.s32.totalorder %v371, 1
        %vm451 = vcmp.eq.s32.totalorder %v372, 1
        %v452 = vsel %vm448, %v432, 0.0
        %v453 = vsel %vm449, %v433, 0.0
        %v454 = vsel %vm450, %v434, 0.0
        %v455 = vsel %vm451, %v435, 0.0
        %v456 = vadd.f32 %v428, %v452
        %v457 = vadd.f32 %v429, %v453
        %v458 = vadd.f32 %v430, %v454
        %v459 = vadd.f32 %v431, %v455
        %v460 = vsub.f32 %v383, %v400
        %v461 = vsub.f32 %v384, %v401
        %v462 = vsub.f32 %v385, %v402
        %v463 = vsub.f32 %v386, %v403
        %v464 = vmul.f32 %v460, 1.442695
        %v465 = vpow.pop %v464
        %v466 = vmul.f32 %v461, 1.442695
        %v467 = vpow.pop %v466
        %v468 = vmul.f32 %v462, 1.442695
        %v469 = vpow.pop %v468
        %v470 = vmul.f32 %v463, 1.442695
        %v471 = vpow.pop %v470
        %v472 = vadd.f32 %v444, %v465
        %v473 = vadd.f32 %v445, %v467
        %v474 = vadd.f32 %v446, %v469
        %v475 = vadd.f32 %v447, %v471
        %vm476 = vcmp.eq.s32.totalorder %v369, 2
        %vm477 = vcmp.eq.s32.totalorder %v370, 2
        %vm478 = vcmp.eq.s32.totalorder %v371, 2
        %vm479 = vcmp.eq.s32.totalorder %v372, 2
        %v480 = vsel %vm476, %v460, 0.0
        %v481 = vsel %vm477, %v461, 0.0
        %v482 = vsel %vm478, %v462, 0.0
        %v483 = vsel %vm479, %v463, 0.0
        %v484 = vadd.f32 %v456, %v480
        %v485 = vadd.f32 %v457, %v481
        %v486 = vadd.f32 %v458, %v482
        %v487 = vadd.f32 %v459, %v483
        %v488 = vsub.f32 %v388, %v400
        %v489 = vsub.f32 %v389, %v401
        %v490 = vsub.f32 %v390, %v402
        %v491 = vsub.f32 %v391, %v403
        %v492 = vmul.f32 %v488, 1.442695
        %v493 = vpow.pop %v492
        %v494 = vmul.f32 %v489, 1.442695
        %v495 = vpow.pop %v494
        %v496 = vmul.f32 %v490, 1.442695
        %v497 = vpow.pop %v496
        %v498 = vmul.f32 %v491, 1.442695
        %v499 = vpow.pop %v498
        %v500 = vadd.f32 %v472, %v493
        %v501 = vadd.f32 %v473, %v495
        %v502 = vadd.f32 %v474, %v497
        %v503 = vadd.f32 %v475, %v499
        %vm504 = vcmp.eq.s32.totalorder %v369, 3
        %vm505 = vcmp.eq.s32.totalorder %v370, 3
        %vm506 = vcmp.eq.s32.totalorder %v371, 3
        %vm507 = vcmp.eq.s32.totalorder %v372, 3
        %v508 = vsel %vm504, %v488, 0.0
        %v509 = vsel %vm505, %v489, 0.0
        %v510 = vsel %vm506, %v490, 0.0
        %v511 = vsel %vm507, %v491, 0.0
        %v512 = vadd.f32 %v484, %v508
        %v513 = vadd.f32 %v485, %v509
        %v514 = vadd.f32 %v486, %v510
        %v515 = vadd.f32 %v487, %v511
        %v516 = vlog2.pop %v500
        %v517 = vmul.f32 %v516, 0.6931472
        %v518 = vlog2.pop %v501
        %v519 = vmul.f32 %v518, 0.6931472
        %v520 = vlog2.pop %v502
        %v521 = vmul.f32 %v520, 0.6931472
        %v522 = vlog2.pop %v503
        %v523 = vmul.f32 %v522, 0.6931472
        %v524 = vsub.f32 %v517, %v512
        %v525 = vsub.f32 %v519, %v513
        %v526 = vsub.f32 %v521, %v514
        %v527 = vsub.f32 %v523, %v515
        %vm528 = vcmp.ge.s32.totalorder %v369, 0
        %vm529 = vcmp.ge.s32.totalorder %v370, 0
        %vm530 = vcmp.ge.s32.totalorder %v371, 0
        %vm531 = vcmp.ge.s32.totalorder %v372, 0
        %v532 = vsel %vm528, %v524, 0.0
        %v533 = vsel %vm529, %v525, 0.0
        %v534 = vsel %vm530, %v526, 0.0
        %v535 = vsel %vm531, %v527, 0.0
        %536 = vst [vmem:[%s349] sm:$0xff] %v532
        %537 = vst [vmem:[%s349 + $0x8] sm:$0xff] %v533
        %538 = vst [vmem:[%s349 + $0x10] sm:$0xff] %v534
        %539 = vst [vmem:[%s349 + $0x18] sm:$0xff] %v535
        %vm540 = vmor %vm420, %vm448
        %vm541 = vmor %vm421, %vm449
        %vm542 = vmor %vm422, %vm450
        %vm543 = vmor %vm423, %vm451
        %v544 = vsel %vm540, %v532, 0.0
        %v545 = vsel %vm541, %v533, 0.0
        %v546 = vsel %vm542, %v534, 0.0
        %v547 = vsel %vm543, %v535, 0.0
        %v548 = vld [vmem:[%s317] sm:$0xff]
        %v549 = vld [vmem:[%s317 + $0x8] sm:$0xff]
        %v550 = vld [vmem:[%s317 + $0x10] sm:$0xff]
        %v551 = vld [vmem:[%s317 + $0x18] sm:$0xff]
        %v552 = vsel %vm476, 1.0, 0.0
        %v553 = vsel %vm477, 1.0, 0.0
        %v554 = vsel %vm478, 1.0, 0.0
        %v555 = vsel %vm479, 1.0, 0.0
        %v556 = vmul.f32 %v548, %v552
        %v557 = vmul.f32 %v549, %v553
        %v558 = vmul.f32 %v550, %v554
        %v559 = vmul.f32 %v551, %v555
        %560 = vst [vmem:[%s356] sm:$0xff] %v556
        %561 = vst [vmem:[%s356 + $0x8] sm:$0xff] %v557
        %562 = vst [vmem:[%s356 + $0x10] sm:$0xff] %v558
        %563 = vst [vmem:[%s356 + $0x18] sm:$0xff] %v559
        %v564 = vsub.f32 %v548, %v552
        %v565 = vsub.f32 %v549, %v553
        %v566 = vsub.f32 %v550, %v554
        %v567 = vsub.f32 %v551, %v555
        %v568 = vmul.f32 %v564, %v564
        %v569 = vmul.f32 %v565, %v565
        %v570 = vmul.f32 %v566, %v566
        %v571 = vmul.f32 %v567, %v567
        %v572 = vadd.f32 %v568, 0.0
        %v573 = vadd.f32 %v569, 0.0
        %v574 = vadd.f32 %v570, 0.0
        %v575 = vadd.f32 %v571, 0.0
        %s576 = scalar_lea.vmem %s317, 32 [#allocation7]
        %v577 = vld [vmem:[%s576] sm:$0xff]
        %v578 = vld [vmem:[%s576 + $0x8] sm:$0xff]
        %v579 = vld [vmem:[%s576 + $0x10] sm:$0xff]
        %v580 = vld [vmem:[%s576 + $0x18] sm:$0xff]
        %v581 = vsel %vm504, 1.0, 0.0
        %v582 = vsel %vm505, 1.0, 0.0
        %v583 = vsel %vm506, 1.0, 0.0
        %v584 = vsel %vm507, 1.0, 0.0
        %v585 = vmul.f32 %v577, %v581
        %v586 = vmul.f32 %v578, %v582
        %v587 = vmul.f32 %v579, %v583
        %v588 = vmul.f32 %v580, %v584
        %s589 = scalar_lea.vmem %s356, 32 [#allocation9]
        %590 = vst [vmem:[%s589] sm:$0xff] %v585
        %591 = vst [vmem:[%s589 + $0x8] sm:$0xff] %v586
        %592 = vst [vmem:[%s589 + $0x10] sm:$0xff] %v587
        %593 = vst [vmem:[%s589 + $0x18] sm:$0xff] %v588
        %v594 = vsub.f32 %v577, %v581
        %v595 = vsub.f32 %v578, %v582
        %v596 = vsub.f32 %v579, %v583
        %v597 = vsub.f32 %v580, %v584
        %v598 = vmul.f32 %v594, %v594
        %v599 = vmul.f32 %v595, %v595
        %v600 = vmul.f32 %v596, %v596
        %v601 = vmul.f32 %v597, %v597
        %v602 = vadd.f32 %v572, %v598
        %v603 = vadd.f32 %v573, %v599
        %v604 = vadd.f32 %v574, %v600
        %v605 = vadd.f32 %v575, %v601
        %v606 = vadd.f32 %v544, %v545
        %v607 = vadd.f32 %v606, %v546
        %v608 = vadd.f32 %v607, %v547
        %v609 = vadd.f32 %v608, 0.0
        %v610 = vadd.f32 %v602, %v603
        %v611 = vadd.f32 %v610, %v604
        %v612 = vadd.f32 %v611, %v605
        %v613 = vadd.f32 %v612, 0.0
        %v614 = vadd.f32 %v552, %v553
        %v615 = vadd.f32 %v614, %v554
        %v616 = vadd.f32 %v615, %v555
        %v617 = vadd.f32 %v616, 0.0
        %v618 = vadd.f32 %v581, %v582
        %v619 = vadd.f32 %v618, %v583
        %v620 = vadd.f32 %v619, %v584
        %v621 = vadd.f32 %v620, 0.0
        %622 = vst [vmem:[%s363] sm:$0xff] %v609
        %623 = vst [vmem:[%s363 + $0x8] sm:$0xff] %v617
        %624 = vst [vmem:[%s363 + $0x10] sm:$0xff] %v621
        %625 = vst [vmem:[%s363 + $0x18] sm:$0xff] %v613
        %s626 = sand.u32 %s135, 1
        %s627 = scalar_lea.sflag [#allocation4], %s626
        %s628 = sand.u32 %s135, 1
        %s629 = smul.addr %s628, 32
        %s630 = scalar_lea.vmem [#allocation8], %s629
        %s631 = sand.u32 %s29, 1
        %s632 = scalar_lea.sflag [#allocation10], %s631
        %s633 = sand.u32 %s163, 1
        %s634 = smul.addr %s633, 64
        %s635 = scalar_lea.vmem [#allocation9], %s634
        %s636 = sand.u32 %s29, 1
        %s637 = scalar_lea.sflag [#allocation10], %s636
        %s638 = sand.u32 %s191, 1
        %s639 = smul.addr %s638, 32
        %s640 = scalar_lea.vmem [#allocation11], %s639
        // Predicated region
        $region45: #{tpu_custom_call.1} parent=31 // pred_check
          %p641 = pneg %p145
        $region46: #{tpu_custom_call.1} parent=31 // pred_check_branch
          %643 = sbr.rel (%p641) target = $region48
        $region47: #{tpu_custom_call.1} parent=31 // pred_region
          %s644 = smul.u32 4, %s34
          %s646 = ssub.s32 512, 512
          %647 = vsyncadd %s627, %s646
          %s648 = smul.addr %s33, 4
          %s649 = sadd.s32 %s644, %s648
          %s650 = smul.addr %s649, 128
          %s651 = scalar_lea.hbm %s3, %s650
          %s652 = sshll.u32 %s630, 4
          %s653 = int_to_ptr.vmem [resolvable:$true] %s652
          %658 = dma.vmem_to_hbm [thread:$0]  %s653, 512, %s651, %s627, 128, 128, 8
        $region48: #{tpu_custom_call.1} parent=31 // pred_fallthru
          _
        // Predicated region
        $region49: #{tpu_custom_call.1} parent=31 // pred_check
          %p659 = pneg %p173
        $region50: #{tpu_custom_call.1} parent=31 // pred_check_branch
          %661 = sbr.rel (%p659) target = $region52
        $region51: #{tpu_custom_call.1} parent=31 // pred_region
          %s662 = smul.u32 4, %s34
          %s664 = ssub.s32 1024, 1024
          %665 = vsyncadd %s632, %s664
          %s666 = smul.addr %s33, 8
          %s667 = sadd.s32 %s662, %s666
          %s668 = smul.addr %s667, 128
          %s669 = scalar_lea.hbm %s4, %s668
          %s670 = sshll.u32 %s635, 4
          %s671 = int_to_ptr.vmem [resolvable:$true] %s670
          %676 = dma.vmem_to_hbm [thread:$0]  %s671, 1024, %s669, %s632, 128, 128, 8
        $region52: #{tpu_custom_call.1} parent=31 // pred_fallthru
          _
        // Predicated region
        $region53: #{tpu_custom_call.1} parent=31 // pred_check
          %p677 = pneg %p201
        $region54: #{tpu_custom_call.1} parent=31 // pred_check_branch
          %679 = sbr.rel (%p677) target = $region56
        $region55: #{tpu_custom_call.1} parent=31 // pred_region
          %s681 = ssub.s32 512, 512
          %682 = vsyncadd %s637, %s681
          %s683 = smul.addr %s34, 4
          %s684 = smul.addr %s33, 4
          %s685 = sadd.s32 %s683, %s684
          %s686 = smul.addr %s685, 128
          %s687 = scalar_lea.hbm %s5, %s686
          %s688 = sshll.u32 %s640, 4
          %s689 = int_to_ptr.vmem [resolvable:$true] %s688
          %694 = dma.vmem_to_hbm [thread:$0]  %s689, 512, %s687, %s637, 128, 128, 8
        $region56: #{tpu_custom_call.1} parent=31 // pred_fallthru
          _
      $region32: #{tpu_custom_call.1} parent=5 // pred_fallthru
        _
      %p695 = scmp.le.s32.totalorder 2, %s24
      // Predicated region
      $region57: #{tpu_custom_call.1} parent=5 // pred_check
        %p696 = pneg %p695
      $region58: #{tpu_custom_call.1} parent=5 // pred_check_branch
        %698 = sbr.rel (%p696) target = $region60
      $region59: #{tpu_custom_call.1} parent=5 // pred_region
        %s699 = ssub.s32 %s24, 2
        // Predicated region
        $region61: #{tpu_custom_call.1} parent=59 // pred_check
          %p700 = pneg %p151
        $region62: #{tpu_custom_call.1} parent=59 // pred_check_branch
          %702 = sbr.rel (%p700) target = $region64
        $region63: #{tpu_custom_call.1} parent=59 // pred_region
          %s703 = sand.u32 %s136, 1
          %s704 = scalar_lea.sflag [#allocation4], %s703
          %s705 = sand.u32 %s136, 1
          %s706 = smul.addr %s705, 32
          %s707 = scalar_lea.vmem [#allocation8], %s706
          %708 = dma.done %s704, 512
        $region64: #{tpu_custom_call.1} parent=59 // pred_fallthru
          _
        // Predicated region
        $region65: #{tpu_custom_call.1} parent=59 // pred_check
          %p709 = pneg %p179
        $region66: #{tpu_custom_call.1} parent=59 // pred_check_branch
          %711 = sbr.rel (%p709) target = $region68
        $region67: #{tpu_custom_call.1} parent=59 // pred_region
          %s712 = sand.u32 %s30, 1
          %s713 = scalar_lea.sflag [#allocation10], %s712
          %s714 = sand.u32 %s164, 1
          %s715 = smul.addr %s714, 64
          %s716 = scalar_lea.vmem [#allocation9], %s715
          %717 = dma.done %s713, 1024
        $region68: #{tpu_custom_call.1} parent=59 // pred_fallthru
          _
        // Predicated region
        $region69: #{tpu_custom_call.1} parent=59 // pred_check
          %p718 = pneg %p207
        $region70: #{tpu_custom_call.1} parent=59 // pred_check_branch
          %720 = sbr.rel (%p718) target = $region72
        $region71: #{tpu_custom_call.1} parent=59 // pred_region
          %s721 = sand.u32 %s30, 1
          %s722 = scalar_lea.sflag [#allocation10], %s721
          %s723 = sand.u32 %s192, 1
          %s724 = smul.addr %s723, 32
          %s725 = scalar_lea.vmem [#allocation11], %s724
          %726 = dma.done %s722, 512
        $region72: #{tpu_custom_call.1} parent=59 // pred_fallthru
          _
      $region60: #{tpu_custom_call.1} parent=5 // pred_fallthru
        _
    $region6: #{tpu_custom_call.1} parent=1 // loop_footer
      %s28 = sadd.s32 1, %s24
    $region7: #{tpu_custom_call.1} parent=1 // loop_footer_branch
      %23 = sbr.rel target = $region3
    $region8: #{tpu_custom_call.1} parent=1 // loop_exit
      _
    %727 = vsyncpa [#allocation3], 1
    %s728 = scalar_lea.sflag [#allocation3], 1
    %729 = vsyncpa %s728, 1
    %730 = vsyncpa [#allocation6], 1
    %s731 = scalar_lea.sflag [#allocation6], 1
    %732 = vsyncpa %s731, 1
    %733 = vsyncpa [#allocation4], 1
    %s734 = scalar_lea.sflag [#allocation4], 1
    %735 = vsyncpa %s734, 1
    %736 = vsyncpa [#allocation10], 1
    %s737 = scalar_lea.sflag [#allocation10], 1
    %738 = vsyncpa %s737, 1

</llo_original>
